<compile_context>
chip_gen: v5e
topology: v5e:2x2
jax: 0.10.0
libtpu: 0.0.40
codegen_flags: <defaults>
</compile_context>

<pallas_src>
import jax
import jax.numpy as jnp
from jax.experimental import pallas as pl
from jax.experimental.pallas import tpu as pltpu


# ~2 MiB per block: with default double buffering (2 input + 2 output buffers) the
# kernel uses ~8 MiB of scoped VMEM, safely inside v5e's 16 MiB default and v7x's
# 32 MiB default (64 MiB physical).
_TARGET_BLOCK_BYTES = 2 * 1024 * 1024
_WORD_BYTES = 4  # all kernel traffic is 32-bit words (native 4-byte dtype or packed)


def _copy_kernel(x_ref, o_ref):
    # Hot path: full-tile VMEM load + unmasked lane-dense store (identity pass).
    o_ref[...] = x_ref[...]


def _plan_slab(n_words):
    """Factor `n_words` 32-bit words into a lane-dense (rows, cols) slab + row tile.

    Returns (rows, cols, tile_rows) with:
      * cols % 128 == 0 and rows * cols == n_words        (no padding needed)
      * tile_rows divides rows exactly
      * tile_rows % 8 == 0, or tile_rows == rows (full-extent block)
      * tile bytes <= _TARGET_BLOCK_BYTES
    Returns None if no such zero-padding factorization exists.
    """
    for cols in (2048, 1024, 512, 256, 128):
        if n_words % cols:
            continue
        rows = n_words // cols
        row_bytes = cols * _WORD_BYTES
        budget_rows = max(1, _TARGET_BLOCK_BYTES // row_bytes)
        if rows <= budget_rows:
            # Single full-extent block (valid even if rows % 8 != 0), grid = (1,).
            return rows, cols, rows
        if rows % 8:
            continue  # cannot row-tile without padding; try narrower cols
        t = (budget_rows // 8) * 8
        while t >= 8 and rows % t:
            t -= 8
        if t >= 8:
            return rows, cols, t
    return None


def _pallas_copy_2d(x2d, tile_rows):
    """Copy a lane-dense (rows, cols) slab through VMEM with a Pallas kernel."""
    rows, cols = x2d.shape
    assert cols % 128 == 0
    assert rows % tile_rows == 0
    grid = (rows // tile_rows,)
    return pl.pallas_call(
        _copy_kernel,
        out_shape=jax.ShapeDtypeStruct((rows, cols), x2d.dtype),
        grid_spec=pltpu.PrefetchScalarGridSpec(
            num_scalar_prefetch=0,
            grid=grid,
            in_specs=[pl.BlockSpec((tile_rows, cols), lambda i: (i, 0))],
            out_specs=pl.BlockSpec((tile_rows, cols), lambda i: (i, 0)),
        ),
        compiler_params=pltpu.CompilerParams(
            dimension_semantics=("parallel",),
        ),
    )(x2d)


class PallasModel:
    """JAX/Pallas counterpart of the (abstract) PyTorch Model."""

    def __init__(self, input_shape, output_shape):
        self.input_shape = tuple(input_shape)
        self.output_shape = tuple(output_shape)
        n_in = 1
        for d in self.input_shape:
            n_in *= d
        n_out = 1
        for d in self.output_shape:
            n_out *= d
        assert n_in == n_out, "input/output shapes must have equal element count"
        self._numel = n_in

    def __call__(self, x):
        assert x.shape == self.input_shape, (
            f"expected {self.input_shape}, got {x.shape}"
        )
        n = self._numel
        if n == 0:
            return jnp.reshape(x, self.output_shape)

        itemsize = x.dtype.itemsize
        flat = jnp.reshape(x, (-1,))  # metadata-only

        # Map the data onto 32-bit words without converting values (bit-exact).
        packed = False
        if itemsize == 4:
            work = flat
        elif itemsize in (1, 2) and (n * itemsize) % 4 == 0 and not jnp.issubdtype(
            x.dtype, jnp.complexfloating
        ):
            ratio = 4 // itemsize
            work = jax.lax.bitcast_convert_type(
                flat.reshape(-1, ratio), jnp.uint32
            )
            packed = True
        else:
            # TODO(synk): ragged sub-word tail / unsupported dtype for 32-bit packing;
            # identity semantics make a metadata-only reshape the exact answer.
            return jnp.reshape(x, self.output_shape)

        n_words = work.shape[0]
        plan = _plan_slab(n_words)
        if plan is None:
            # TODO(synk): no zero-padding (8,128)-aligned factorization; identity
            # semantics make a metadata-only reshape the exact (and fastest) answer.
            return jnp.reshape(x, self.output_shape)

        rows, cols, tile_rows = plan
        slab = work.reshape(rows, cols)  # metadata-only
        out_flat = _pallas_copy_2d(slab, tile_rows).reshape(-1)

        if packed:
            out_flat = jax.lax.bitcast_convert_type(out_flat, x.dtype).reshape(-1)

        return jnp.reshape(out_flat, self.output_shape)


if __name__ == "__main__":
    key = jax.random.PRNGKey(0)
    input_shape = (2, 4, 16, 16)        # NCHW-style small example
    output_shape = (2, 4 * 16 * 16)     # same element count, "flattened" output

    x = jax.random.normal(key, input_shape, dtype=jnp.float32)

    model = PallasModel(input_shape, output_shape)
    y = jax.block_until_ready(model(x))

    # Sanity check: identity/reshape semantics preserved bit-exactly.
    assert y.shape == output_shape
    assert y.dtype == x.dtype
    assert bool(jnp.array_equal(y.reshape(-1), x.reshape(-1)))

    print("KERNEL_OK")
</pallas_src>

<mosaic_0001>
module attributes {stable_mosaic.version = 11 : i64} {
  func.func @_copy_kernel(%arg0: i32, %arg1: memref<1x2048xf32, #tpu.memory_space<vmem>>, %arg2: memref<1x2048xf32, #tpu.memory_space<vmem>>) attributes {dimension_semantics = [#tpu.dimension_semantics<parallel>], iteration_bounds = array<i64: 1>, scalar_prefetch = 0 : i64, scratch_operands = 0 : i64, tpu.core_type = #tpu.core_type<tc>, window_params = [{transform_indices = @transform_0, window_bounds = array<i64: 1, 2048>}, {transform_indices = @transform_1, window_bounds = array<i64: 1, 2048>}]} {
    %c0 = arith.constant 0 : index
    %c0_0 = arith.constant 0 : index
    %0 = vector.load %arg1[%c0, %c0_0] : memref<1x2048xf32, #tpu.memory_space<vmem>>, vector<1x2048xf32>
    %c0_1 = arith.constant 0 : index
    %c0_2 = arith.constant 0 : index
    %1 = vector.load %arg2[%c0_1, %c0_2] : memref<1x2048xf32, #tpu.memory_space<vmem>>, vector<1x2048xf32>
    tpu.vector_store %arg2[%c0_1, %c0_2], %0 {strides = array<i32>} : memref<1x2048xf32, #tpu.memory_space<vmem>>, vector<1x2048xf32>,
    return
  }
  func.func @transform_0(%arg0: i32) -> (i32, i32) {
    %c0_i32 = arith.constant 0 : i32
    %c0_i32_0 = arith.constant 0 : i32
    return %arg0, %c0_i32 : i32, i32
  }
  func.func @transform_1(%arg0: i32) -> (i32, i32) {
    %c0_i32 = arith.constant 0 : i32
    %c0_i32_0 = arith.constant 0 : i32
    return %arg0, %c0_i32 : i32, i32
  }
}

</mosaic_0001>

<llo_original>
// kernel: tpu_custom_call.1
$region0: #{tpu_custom_call.1}
  #allocation0 [shape = 'u32[]', space=smem, size = 0x4, offset = 0x4, fixed_abs, tag = 'smem constant byte address 0x4 - core index']
  #allocation1 [shape = 'u32[72,128]{1,0:T(1,128)}', space=vmem, size = 0x9000, scoped, tag = 'internal scratch']
  %s0 = inlined_call_operand.hbm [shape: f32[1,2048], index: 0, kind: input, shape index: {}]
  %s1 = inlined_call_operand.hbm [shape: f32[1,2048], index: 1, kind: output, shape index: {}]
  %s2 = sld [smem:[#allocation0]]
  $region18: #{tpu_custom_call.1} parent=0
    _
  %s4 = ssub.s32 1, %s2
  %s5 = scalar_select 0, %s4, %s2
  $region1: #{tpu_custom_call.1} parent=0
    #allocation2 [shape = 'u8[8192]{0}', space=vmem, size = 0x2000, scoped, tag = 'input window, operand 0, single buffered']
    #allocation3 [shape = 's32[1]{0}', space=sflag, size = 0x4, scoped, tag = 'scoped memory for tpu_custom_call.1']
    #allocation4 [shape = 's32[1]{0}', space=sflag, size = 0x4, scoped, tag = 'scoped memory for tpu_custom_call.1']
    #allocation5 [shape = 'u8[8192]{0}', space=vmem, size = 0x2000, scoped, tag = 'output window, operand 0, single buffered']
    %6 = vsyncpa [#allocation3], 0
    %7 = vsyncpa [#allocation4], 0
    // Predicated region
    $region2: #{tpu_custom_call.1} parent=1 // pred_check
      _
    $region3: #{tpu_custom_call.1} parent=1 // pred_check_branch
      %9 = sbr.rel (0) target = $region5
    $region4: #{tpu_custom_call.1} parent=1 // pred_region
      %11 = vsyncadd [#allocation3], 0
      %s13 = sshll.u32 %s0, 4
      %s14 = int_to_ptr.hbm [resolvable:$true] %s13
      %s15 = sshll.u32 [#allocation2], 4
      %s16 = int_to_ptr.vmem [resolvable:$true] %s15
      %18 = dma.hbm_to_vmem [thread:$0]  %s14, 256, %s16, [#allocation3]
    $region5: #{tpu_custom_call.1} parent=1 // pred_fallthru
      _
    // Predicated region
    $region6: #{tpu_custom_call.1} parent=1 // pred_check
      _
    $region7: #{tpu_custom_call.1} parent=1 // pred_check_branch
      %20 = sbr.rel (0) target = $region9
    $region8: #{tpu_custom_call.1} parent=1 // pred_region
      %22 = dma.done [#allocation3], 256
    $region9: #{tpu_custom_call.1} parent=1 // pred_fallthru
      _
    %v23 = vld [vmem:[#allocation2] sm:$0xff]
    %v24 = vld [vmem:[#allocation2 + $0x8] sm:$0xff]
    %25 = vst [vmem:[#allocation5] sm:$0xff] %v23
    %26 = vst [vmem:[#allocation5 + $0x8] sm:$0xff] %v24
    // Predicated region
    $region10: #{tpu_custom_call.1} parent=1 // pred_check
      _
    $region11: #{tpu_custom_call.1} parent=1 // pred_check_branch
      %28 = sbr.rel (0) target = $region13
    $region12: #{tpu_custom_call.1} parent=1 // pred_region
      %30 = vsyncadd [#allocation4], 0
      %s32 = sshll.u32 [#allocation5], 4
      %s33 = int_to_ptr.vmem [resolvable:$true] %s32
      %s34 = sshll.u32 %s1, 4
      %s35 = int_to_ptr.hbm [resolvable:$true] %s34
      %37 = dma.vmem_to_hbm [thread:$0]  %s33, 256, %s35, [#allocation4]
    $region13: #{tpu_custom_call.1} parent=1 // pred_fallthru
      _
    // Predicated region
    $region14: #{tpu_custom_call.1} parent=1 // pred_check
      _
    $region15: #{tpu_custom_call.1} parent=1 // pred_check_branch
      %39 = sbr.rel (0) target = $region17
    $region16: #{tpu_custom_call.1} parent=1 // pred_region
      %41 = dma.done [#allocation4], 256
    $region17: #{tpu_custom_call.1} parent=1 // pred_fallthru
      _
    %42 = vsyncpa [#allocation3], 1
    %43 = vsyncpa [#allocation4], 1

</llo_original>
